<compile_context>
chip_gen: v7x
topology: tpu7x:2x2x1
jax: 0.10.0
libtpu: 0.0.40
codegen_flags: <defaults>
</compile_context>

<pallas_src>
import jax
import jax.numpy as jnp
from jax.experimental import pallas as pl
from jax.experimental.pallas import tpu as pltpu


def _mlp_proj_kernel(x_ref, w1_ref, b1_ref, w2_ref, b2_ref, g_ref, beta_ref,
                     o_ref):
    # x_ref: (tm, d_in) tile of rows; weights/affine are full (small) VMEM blocks.
    x = x_ref[...]                       # native dtype (f32 or bf16) -> MXU

    # Linear 1 (MXU, f32 accumulation) + bias
    h = jnp.dot(x, w1_ref[...], preferred_element_type=jnp.float32)
    h = h + b1_ref[...].astype(jnp.float32)

    # Exact GELU (matches torch.nn.GELU() default, erf-based)
    h = 0.5 * h * (1.0 + jax.lax.erf(h * 0.7071067811865476))

    # Linear 2 (MXU, f32 accumulation) + bias.  Cast the f32 hidden to the
    # weight dtype so a bf16 W2 gets a bf16 LHS (native MXU rate).
    y = jnp.dot(h.astype(w2_ref.dtype), w2_ref[...],
                preferred_element_type=jnp.float32)
    y = y + b2_ref[...].astype(jnp.float32)

    # LayerNorm over last dim (eps=1e-5), elementwise affine, in f32.
    mean = jnp.mean(y, axis=-1, keepdims=True)
    centered = y - mean
    var = jnp.mean(centered * centered, axis=-1, keepdims=True)
    y_norm = centered * jax.lax.rsqrt(var + 1e-5)
    out = y_norm * g_ref[...].astype(jnp.float32) + beta_ref[...].astype(jnp.float32)

    o_ref[...] = out.astype(o_ref.dtype)


def _round_up(x, m):
    return (x + m - 1) // m * m


def mlp_proj_model(image_embeds, params, *, tm=256, mxu_dtype=None):
    """image_embeds: (B, S, clip_dim) -> (B, S, cross_dim).

    tm:        row tile (rows of B*S processed per grid step).  Default 256
               fills the MXU; it is automatically shrunk for tiny inputs and
               the last tile is zero-padded (pad rows are sliced off).
    mxu_dtype: optional dtype (e.g. jnp.bfloat16) for the matmul operands
               (x, W1, W2).  Accumulation / GELU / LayerNorm stay in f32 and
               the output keeps image_embeds.dtype.
    """
    w1, b1, w2, b2, gamma, beta = (params["w1"], params["b1"], params["w2"],
                                   params["b2"], params["gamma"], params["beta"])
    B, S, d_in = image_embeds.shape
    d_hidden = w1.shape[1]
    d_out = w2.shape[1]
    out_dtype = image_embeds.dtype
    M = B * S

    x2d = image_embeds.reshape(M, d_in)
    if mxu_dtype is not None:
        x2d = x2d.astype(mxu_dtype)
        w1 = w1.astype(mxu_dtype)
        w2 = w2.astype(mxu_dtype)

    # Pick an effective row tile: no bigger than (M rounded up to a sublane
    # multiple), otherwise the requested tm.  Pad rows so the grid is exact;
    # padded rows produce well-defined (eps-guarded) garbage that is discarded.
    tm_eff = min(tm, _round_up(M, 8))
    m_pad = _round_up(M, tm_eff)
    if m_pad != M:
        x2d = jnp.pad(x2d, ((0, m_pad - M), (0, 0)))
    grid = m_pad // tm_eff

    b1_2d = b1.reshape(1, d_hidden)
    b2_2d = b2.reshape(1, d_out)
    g_2d = gamma.reshape(1, d_out)
    beta_2d = beta.reshape(1, d_out)

    out2d = pl.pallas_call(
        _mlp_proj_kernel,
        out_shape=jax.ShapeDtypeStruct((m_pad, d_out), out_dtype),
        grid=(grid,),
        in_specs=[
            pl.BlockSpec((tm_eff, d_in), lambda i: (i, 0)),      # x rows
            pl.BlockSpec((d_in, d_hidden), lambda i: (0, 0)),    # W1 (resident)
            pl.BlockSpec((1, d_hidden), lambda i: (0, 0)),       # b1
            pl.BlockSpec((d_hidden, d_out), lambda i: (0, 0)),   # W2 (resident)
            pl.BlockSpec((1, d_out), lambda i: (0, 0)),          # b2
            pl.BlockSpec((1, d_out), lambda i: (0, 0)),          # gamma
            pl.BlockSpec((1, d_out), lambda i: (0, 0)),          # beta
        ],
        out_specs=pl.BlockSpec((tm_eff, d_out), lambda i: (i, 0)),
        compiler_params=pltpu.CompilerParams(
            dimension_semantics=("parallel",)),   # shards row tiles across TCs (v7x)
    )(x2d, w1, b1_2d, w2, b2_2d, g_2d, beta_2d)

    if m_pad != M:
        out2d = out2d[:M]
    return out2d.reshape(B, S, d_out)


def init_params(key, clip_embeddings_dim, cross_attention_dim, dtype=jnp.float32):
    k1, k2, k3, k4, k5, k6 = jax.random.split(key, 6)
    s1 = 1.0 / jnp.sqrt(clip_embeddings_dim).astype(jnp.float32)
    s2 = 1.0 / jnp.sqrt(clip_embeddings_dim).astype(jnp.float32)
    return {
        # stored as (in, out) so the kernel does x @ W (torch Linear weight.T)
        "w1": jax.random.uniform(k1, (clip_embeddings_dim, clip_embeddings_dim),
                                 dtype, -s1, s1),
        "b1": jax.random.uniform(k2, (clip_embeddings_dim,), dtype, -s1, s1),
        "w2": jax.random.uniform(k3, (clip_embeddings_dim, cross_attention_dim),
                                 dtype, -s2, s2),
        "b2": jax.random.uniform(k4, (cross_attention_dim,), dtype, -s2, s2),
        # LayerNorm default init would be ones/zeros; small perturbations keep
        # the test non-trivial while deterministic.
        "gamma": 1.0 + 0.01 * jax.random.normal(k5, (cross_attention_dim,), dtype),
        "beta": 0.01 * jax.random.normal(k6, (cross_attention_dim,), dtype),
    }


def _reference(image_embeds, p):
    x = image_embeds.astype(jnp.float32)
    h = x @ p["w1"] + p["b1"]
    h = jax.nn.gelu(h, approximate=False)
    y = h @ p["w2"] + p["b2"]
    mean = jnp.mean(y, axis=-1, keepdims=True)
    var = jnp.mean((y - mean) ** 2, axis=-1, keepdims=True)
    yn = (y - mean) / jnp.sqrt(var + 1e-5)
    return yn * p["gamma"] + p["beta"]


if __name__ == "__main__":
    key = jax.random.PRNGKey(0)
    kx, kp = jax.random.split(key)

    batch, seq = 2, 8
    clip_embeddings_dim = 256
    cross_attention_dim = 128

    image_embeds = jax.random.normal(kx, (batch, seq, clip_embeddings_dim),
                                     jnp.float32)
    params = init_params(kp, clip_embeddings_dim, cross_attention_dim)

    ref = _reference(image_embeds, params)

    # Exact (f32-operand) path: matches torch semantics to tight tolerance.
    out = mlp_proj_model(image_embeds, params)
    out = jax.block_until_ready(out)
    assert out.shape == (batch, seq, cross_attention_dim)
    assert jnp.allclose(out, ref, atol=1e-4, rtol=1e-4), "mismatch vs reference (f32)"

    # Fast path: bf16 MXU operands, f32 accumulation (perf-recommended config).
    out_bf16 = mlp_proj_model(image_embeds, params, mxu_dtype=jnp.bfloat16)
    out_bf16 = jax.block_until_ready(out_bf16)
    assert out_bf16.shape == (batch, seq, cross_attention_dim)
    assert jnp.allclose(out_bf16, ref, atol=1e-1, rtol=1e-1), \
        "mismatch vs reference (bf16 MXU path)"

    print("KERNEL_OK")
</pallas_src>

<mosaic_0001>
module attributes {stable_mosaic.version = 11 : i64} {
  func.func @_mlp_proj_kernel(%arg0: i32, %arg1: memref<16x256xf32, #tpu.memory_space<vmem>>, %arg2: memref<256x256xf32, #tpu.memory_space<vmem>>, %arg3: memref<1x256xf32, #tpu.memory_space<vmem>>, %arg4: memref<256x128xf32, #tpu.memory_space<vmem>>, %arg5: memref<1x128xf32, #tpu.memory_space<vmem>>, %arg6: memref<1x128xf32, #tpu.memory_space<vmem>>, %arg7: memref<1x128xf32, #tpu.memory_space<vmem>>, %arg8: memref<16x128xf32, #tpu.memory_space<vmem>>) attributes {dimension_semantics = [#tpu.dimension_semantics<parallel>], iteration_bounds = array<i64: 1>, scalar_prefetch = 0 : i64, scratch_operands = 0 : i64, tpu.core_type = #tpu.core_type<tc>, window_params = [{transform_indices = @transform_0, window_bounds = array<i64: 16, 256>}, {pipeline_mode = #tpu.pipeline_mode<synchronous>, transform_indices = @transform_1, window_bounds = array<i64: 256, 256>}, {pipeline_mode = #tpu.pipeline_mode<synchronous>, transform_indices = @transform_2, window_bounds = array<i64: 1, 256>}, {pipeline_mode = #tpu.pipeline_mode<synchronous>, transform_indices = @transform_3, window_bounds = array<i64: 256, 128>}, {pipeline_mode = #tpu.pipeline_mode<synchronous>, transform_indices = @transform_4, window_bounds = array<i64: 1, 128>}, {pipeline_mode = #tpu.pipeline_mode<synchronous>, transform_indices = @transform_5, window_bounds = array<i64: 1, 128>}, {pipeline_mode = #tpu.pipeline_mode<synchronous>, transform_indices = @transform_6, window_bounds = array<i64: 1, 128>}, {transform_indices = @transform_7, window_bounds = array<i64: 16, 128>}]} {
    %c0 = arith.constant 0 : index
    %c0_0 = arith.constant 0 : index
    %0 = vector.load %arg1[%c0, %c0_0] : memref<16x256xf32, #tpu.memory_space<vmem>>, vector<16x256xf32>
    %c0_1 = arith.constant 0 : index
    %c0_2 = arith.constant 0 : index
    %1 = vector.load %arg2[%c0_1, %c0_2] : memref<256x256xf32, #tpu.memory_space<vmem>>, vector<256x256xf32>
    %cst = arith.constant dense<0.000000e+00> : vector<16x256xf32>
    %2 = tpu.matmul %0, %1, %cst {dimension_numbers = #tpu.dot_dimension_numbers<[1], [0], [0], [1], [0, 0, 1, 1], [], []>} : vector<16x256xf32>, vector<256x256xf32>, vector<16x256xf32> -> vector<16x256xf32>
    %c0_3 = arith.constant 0 : index
    %c0_4 = arith.constant 0 : index
    %3 = vector.load %arg3[%c0_3, %c0_4] : memref<1x256xf32, #tpu.memory_space<vmem>>, vector<1x256xf32>
    %4 = vector.broadcast %3 : vector<1x256xf32> to vector<16x256xf32>
    %5 = arith.addf %2, %4 : vector<16x256xf32>
    %cst_5 = arith.constant 5.000000e-01 : f32
    %6 = vector.broadcast %cst_5 : f32 to vector<16x256xf32>
    %7 = arith.mulf %6, %5 : vector<16x256xf32>
    %cst_6 = arith.constant 0.707106769 : f32
    %8 = vector.broadcast %cst_6 : f32 to vector<16x256xf32>
    %9 = arith.mulf %5, %8 : vector<16x256xf32>
    %10 = math.erf %9 : vector<16x256xf32>
    %cst_7 = arith.constant 1.000000e+00 : f32
    %11 = vector.broadcast %cst_7 : f32 to vector<16x256xf32>
    %12 = arith.addf %11, %10 : vector<16x256xf32>
    %13 = arith.mulf %7, %12 : vector<16x256xf32>
    %c0_8 = arith.constant 0 : index
    %c0_9 = arith.constant 0 : index
    %14 = vector.load %arg4[%c0_8, %c0_9] : memref<256x128xf32, #tpu.memory_space<vmem>>, vector<256x128xf32>
    %cst_10 = arith.constant dense<0.000000e+00> : vector<16x128xf32>
    %15 = tpu.matmul %13, %14, %cst_10 {dimension_numbers = #tpu.dot_dimension_numbers<[1], [0], [0], [1], [0, 0, 1, 1], [], []>} : vector<16x256xf32>, vector<256x128xf32>, vector<16x128xf32> -> vector<16x128xf32>
    %c0_11 = arith.constant 0 : index
    %c0_12 = arith.constant 0 : index
    %16 = vector.load %arg5[%c0_11, %c0_12] : memref<1x128xf32, #tpu.memory_space<vmem>>, vector<1x128xf32>
    %17 = vector.broadcast %16 : vector<1x128xf32> to vector<16x128xf32>
    %18 = arith.addf %15, %17 : vector<16x128xf32>
    %cst_13 = arith.constant dense<0.000000e+00> : vector<16xf32>
    %19 = vector.multi_reduction <add>, %18, %cst_13 [1] : vector<16x128xf32> to vector<16xf32>
    %20 = vector.shape_cast %19 : vector<16xf32> to vector<16x1xf32>
    %cst_14 = arith.constant 1.280000e+02 : f32
    %21 = vector.broadcast %cst_14 : f32 to vector<16x1xf32>
    %22 = arith.divf %20, %21 : vector<16x1xf32>
    %23 = vector.broadcast %22 : vector<16x1xf32> to vector<16x128xf32>
    %24 = arith.subf %18, %23 : vector<16x128xf32>
    %25 = arith.mulf %24, %24 : vector<16x128xf32>
    %cst_15 = arith.constant dense<0.000000e+00> : vector<16xf32>
    %26 = vector.multi_reduction <add>, %25, %cst_15 [1] : vector<16x128xf32> to vector<16xf32>
    %27 = vector.shape_cast %26 : vector<16xf32> to vector<16x1xf32>
    %cst_16 = arith.constant 1.280000e+02 : f32
    %28 = vector.broadcast %cst_16 : f32 to vector<16x1xf32>
    %29 = arith.divf %27, %28 : vector<16x1xf32>
    %cst_17 = arith.constant 9.99999974E-6 : f32
    %30 = vector.broadcast %cst_17 : f32 to vector<16x1xf32>
    %31 = arith.addf %29, %30 : vector<16x1xf32>
    %32 = math.rsqrt %31 : vector<16x1xf32>
    %33 = vector.broadcast %32 : vector<16x1xf32> to vector<16x128xf32>
    %34 = arith.mulf %24, %33 : vector<16x128xf32>
    %c0_18 = arith.constant 0 : index
    %c0_19 = arith.constant 0 : index
    %35 = vector.load %arg6[%c0_18, %c0_19] : memref<1x128xf32, #tpu.memory_space<vmem>>, vector<1x128xf32>
    %36 = vector.broadcast %35 : vector<1x128xf32> to vector<16x128xf32>
    %37 = arith.mulf %34, %36 : vector<16x128xf32>
    %c0_20 = arith.constant 0 : index
    %c0_21 = arith.constant 0 : index
    %38 = vector.load %arg7[%c0_20, %c0_21] : memref<1x128xf32, #tpu.memory_space<vmem>>, vector<1x128xf32>
    %39 = vector.broadcast %38 : vector<1x128xf32> to vector<16x128xf32>
    %40 = arith.addf %37, %39 : vector<16x128xf32>
    %c0_22 = arith.constant 0 : index
    %c0_23 = arith.constant 0 : index
    %41 = vector.load %arg8[%c0_22, %c0_23] : memref<16x128xf32, #tpu.memory_space<vmem>>, vector<16x128xf32>
    tpu.vector_store %arg8[%c0_22, %c0_23], %40 {strides = array<i32>} : memref<16x128xf32, #tpu.memory_space<vmem>>, vector<16x128xf32>,
    return
  }
  func.func @transform_0(%arg0: i32) -> (i32, i32) {
    %c0_i32 = arith.constant 0 : i32
    %c0_i32_0 = arith.constant 0 : i32
    return %arg0, %c0_i32 : i32, i32
  }
  func.func @transform_1(%arg0: i32) -> (i32, i32) {
    %c0_i32 = arith.constant 0 : i32
    %c0_i32_0 = arith.constant 0 : i32
    %c0_i32_1 = arith.constant 0 : i32
    return %c0_i32, %c0_i32_0 : i32, i32
  }
  func.func @transform_2(%arg0: i32) -> (i32, i32) {
    %c0_i32 = arith.constant 0 : i32
    %c0_i32_0 = arith.constant 0 : i32
    %c0_i32_1 = arith.constant 0 : i32
    return %c0_i32, %c0_i32_0 : i32, i32
  }
  func.func @transform_3(%arg0: i32) -> (i32, i32) {
    %c0_i32 = arith.constant 0 : i32
    %c0_i32_0 = arith.constant 0 : i32
    %c0_i32_1 = arith.constant 0 : i32
    return %c0_i32, %c0_i32_0 : i32, i32
  }
  func.func @transform_4(%arg0: i32) -> (i32, i32) {
    %c0_i32 = arith.constant 0 : i32
    %c0_i32_0 = arith.constant 0 : i32
    %c0_i32_1 = arith.constant 0 : i32
    return %c0_i32, %c0_i32_0 : i32, i32
  }
  func.func @transform_5(%arg0: i32) -> (i32, i32) {
    %c0_i32 = arith.constant 0 : i32
    %c0_i32_0 = arith.constant 0 : i32
    %c0_i32_1 = arith.constant 0 : i32
    return %c0_i32, %c0_i32_0 : i32, i32
  }
  func.func @transform_6(%arg0: i32) -> (i32, i32) {
    %c0_i32 = arith.constant 0 : i32
    %c0_i32_0 = arith.constant 0 : i32
    %c0_i32_1 = arith.constant 0 : i32
    return %c0_i32, %c0_i32_0 : i32, i32
  }
  func.func @transform_7(%arg0: i32) -> (i32, i32) {
    %c0_i32 = arith.constant 0 : i32
    %c0_i32_0 = arith.constant 0 : i32
    return %arg0, %c0_i32 : i32, i32
  }
}

</mosaic_0001>

<llo_original>
// kernel: tpu_custom_call.1
$region0: #{tpu_custom_call.1}
  #allocation0 [shape = 'u32[]', space=smem, size = 0x4, offset = 0x4, fixed_abs, tag = 'smem constant byte address 0x4 - core index']
  #allocation1 [shape = 'u32[144,128]{1,0:T(1,128)}', space=vmem, size = 0x12000, scoped, tag = 'internal scratch']
  %s0 = inlined_call_operand.hbm [shape: f32[16,256], index: 0, kind: input, shape index: {}]
  %s1 = inlined_call_operand.hbm [shape: f32[256,256], index: 1, kind: input, shape index: {}]
  %s2 = inlined_call_operand.vmem [shape: f32[1,256], index: 2, kind: input, shape index: {}]
  %s3 = inlined_call_operand.hbm [shape: f32[256,128], index: 3, kind: input, shape index: {}]
  %s4 = inlined_call_operand.vmem [shape: f32[1,128], index: 4, kind: input, shape index: {}]
  %s5 = inlined_call_operand.vmem [shape: f32[1,128], index: 5, kind: input, shape index: {}]
  %s6 = inlined_call_operand.vmem [shape: f32[1,128], index: 6, kind: input, shape index: {}]
  %s7 = inlined_call_operand.hbm [shape: f32[16,128], index: 7, kind: output, shape index: {}]
  %s8 = sld [smem:[#allocation0]]
  $region50: #{tpu_custom_call.1} parent=0
    _
  %s10 = ssub.s32 1, %s8
  %s11 = scalar_select 0, %s10, %s8
  $region1: #{tpu_custom_call.1} parent=0
    #allocation2 [shape = 'u8[16384]{0}', space=vmem, size = 0x4000, scoped, tag = 'input window, operand 0, single buffered']
    #allocation3 [shape = 's32[1]{0}', space=sflag, size = 0x4, scoped, tag = 'scoped memory for tpu_custom_call.1']
    #allocation4 [shape = 's32[1]{0}', space=sflag, size = 0x4, scoped, tag = 'scoped memory for tpu_custom_call.1']
    #allocation5 [shape = 'u8[262144]{0}', space=vmem, size = 0x40000, scoped, tag = 'input window, operand 1, single buffered']
    #allocation6 [shape = 's32[1]{0}', space=sflag, size = 0x4, scoped, tag = 'scoped memory for tpu_custom_call.1']
    #allocation7 [shape = 'u8[131072]{0}', space=vmem, size = 0x20000, scoped, tag = 'input window, operand 3, single buffered']
    #allocation8 [shape = 'u8[8192]{0}', space=vmem, size = 0x2000, scoped, tag = 'output window, operand 0, single buffered']
    %12 = vsyncpa [#allocation3], 0
    %13 = vsyncpa [#allocation6], 0
    %14 = vsyncpa [#allocation4], 0
    // Predicated region
    $region2: #{tpu_custom_call.1} parent=1 // pred_check
      _
    $region3: #{tpu_custom_call.1} parent=1 // pred_check_branch
      %16 = sbr.rel (0) target = $region5
    $region4: #{tpu_custom_call.1} parent=1 // pred_region
      %s18 = ssub.s32 512, 512
      %19 = vsyncadd [#allocation3], %s18
      %s20 = sshll.u32 [#allocation2], 4
      %s21 = int_to_ptr.vmem [resolvable:$true] %s20
      %26 = dma.hbm_to_vmem [thread:$0]  %s0, 512, %s21, [#allocation3], 256, 256, 16
    $region5: #{tpu_custom_call.1} parent=1 // pred_fallthru
      _
    // Predicated region
    $region6: #{tpu_custom_call.1} parent=1 // pred_check
      _
    $region7: #{tpu_custom_call.1} parent=1 // pred_check_branch
      %28 = sbr.rel (0) target = $region9
    $region8: #{tpu_custom_call.1} parent=1 // pred_region
      %s30 = ssub.s32 8192, 8192
      %31 = vsyncadd [#allocation6], %s30
      %s32 = sshll.u32 [#allocation5], 4
      %s33 = int_to_ptr.vmem [resolvable:$true] %s32
      %38 = dma.hbm_to_vmem [thread:$0]  %s1, 8192, %s33, [#allocation6], 256, 256, 16
    $region9: #{tpu_custom_call.1} parent=1 // pred_fallthru
      _
    // Predicated region
    $region10: #{tpu_custom_call.1} parent=1 // pred_check
      _
    $region11: #{tpu_custom_call.1} parent=1 // pred_check_branch
      %40 = sbr.rel (0) target = $region13
    $region12: #{tpu_custom_call.1} parent=1 // pred_region
      _
    $region13: #{tpu_custom_call.1} parent=1 // pred_fallthru
      _
    // Predicated region
    $region14: #{tpu_custom_call.1} parent=1 // pred_check
      _
    $region15: #{tpu_custom_call.1} parent=1 // pred_check_branch
      %42 = sbr.rel (0) target = $region17
    $region16: #{tpu_custom_call.1} parent=1 // pred_region
      %s44 = ssub.s32 4096, 4096
      %45 = vsyncadd [#allocation6], %s44
      %s46 = sshll.u32 [#allocation7], 4
      %s47 = int_to_ptr.vmem [resolvable:$true] %s46
      %52 = dma.hbm_to_vmem [thread:$0]  %s3, 4096, %s47, [#allocation6], 128, 128, 8
    $region17: #{tpu_custom_call.1} parent=1 // pred_fallthru
      _
    // Predicated region
    $region18: #{tpu_custom_call.1} parent=1 // pred_check
      _
    $region19: #{tpu_custom_call.1} parent=1 // pred_check_branch
      %54 = sbr.rel (0) target = $region21
    $region20: #{tpu_custom_call.1} parent=1 // pred_region
      _
    $region21: #{tpu_custom_call.1} parent=1 // pred_fallthru
      _
    // Predicated region
    $region22: #{tpu_custom_call.1} parent=1 // pred_check
      _
    $region23: #{tpu_custom_call.1} parent=1 // pred_check_branch
      %56 = sbr.rel (0) target = $region25
    $region24: #{tpu_custom_call.1} parent=1 // pred_region
      _
    $region25: #{tpu_custom_call.1} parent=1 // pred_fallthru
      _
    // Predicated region
    $region26: #{tpu_custom_call.1} parent=1 // pred_check
      _
    $region27: #{tpu_custom_call.1} parent=1 // pred_check_branch
      %58 = sbr.rel (0) target = $region29
    $region28: #{tpu_custom_call.1} parent=1 // pred_region
      _
    $region29: #{tpu_custom_call.1} parent=1 // pred_fallthru
      _
    // Predicated region
    $region30: #{tpu_custom_call.1} parent=1 // pred_check
      _
    $region31: #{tpu_custom_call.1} parent=1 // pred_check_branch
      %60 = sbr.rel (0) target = $region33
    $region32: #{tpu_custom_call.1} parent=1 // pred_region
      %61 = dma.done [#allocation3], 512
    $region33: #{tpu_custom_call.1} parent=1 // pred_fallthru
      _
    // Predicated region
    $region34: #{tpu_custom_call.1} parent=1 // pred_check
      _
    $region35: #{tpu_custom_call.1} parent=1 // pred_check_branch
      %63 = sbr.rel (0) target = $region37
    $region36: #{tpu_custom_call.1} parent=1 // pred_region
      %64 = dma.done [#allocation6], 8192
    $region37: #{tpu_custom_call.1} parent=1 // pred_fallthru
      _
    // Predicated region
    $region38: #{tpu_custom_call.1} parent=1 // pred_check
      _
    $region39: #{tpu_custom_call.1} parent=1 // pred_check_branch
      %66 = sbr.rel (0) target = $region41
    $region40: #{tpu_custom_call.1} parent=1 // pred_region
      %67 = dma.done [#allocation6], 4096
    $region41: #{tpu_custom_call.1} parent=1 // pred_fallthru
      _
    %v68 = vld [vmem:[#allocation2] sm:$0xff]
    %v69 = vld [vmem:[#allocation2 + $0x8] sm:$0xff]
    %v70 = vld [vmem:[#allocation2 + $0x10] sm:$0xff]
    %v71 = vld [vmem:[#allocation2 + $0x18] sm:$0xff]
    %v72 = vld [vmem:[#allocation5] sm:$0xff]
    %v73 = vld [vmem:[#allocation5 + $0x8] sm:$0xff]
    %v74 = vld [vmem:[#allocation5 + $0x10] sm:$0xff]
    %v75 = vld [vmem:[#allocation5 + $0x18] sm:$0xff]
    %v76 = vld [vmem:[#allocation5 + $0x20] sm:$0xff]
    %v77 = vld [vmem:[#allocation5 + $0x28] sm:$0xff]
    %v78 = vld [vmem:[#allocation5 + $0x30] sm:$0xff]
    %v79 = vld [vmem:[#allocation5 + $0x38] sm:$0xff]
    %v80 = vld [vmem:[#allocation5 + $0x40] sm:$0xff]
    %v81 = vld [vmem:[#allocation5 + $0x48] sm:$0xff]
    %v82 = vld [vmem:[#allocation5 + $0x50] sm:$0xff]
    %v83 = vld [vmem:[#allocation5 + $0x58] sm:$0xff]
    %v84 = vld [vmem:[#allocation5 + $0x60] sm:$0xff]
    %v85 = vld [vmem:[#allocation5 + $0x68] sm:$0xff]
    %v86 = vld [vmem:[#allocation5 + $0x70] sm:$0xff]
    %v87 = vld [vmem:[#allocation5 + $0x78] sm:$0xff]
    %v88 = vld [vmem:[#allocation5 + $0x80] sm:$0xff]
    %v89 = vld [vmem:[#allocation5 + $0x88] sm:$0xff]
    %v90 = vld [vmem:[#allocation5 + $0x90] sm:$0xff]
    %v91 = vld [vmem:[#allocation5 + $0x98] sm:$0xff]
    %v92 = vld [vmem:[#allocation5 + $0xa0] sm:$0xff]
    %v93 = vld [vmem:[#allocation5 + $0xa8] sm:$0xff]
    %v94 = vld [vmem:[#allocation5 + $0xb0] sm:$0xff]
    %v95 = vld [vmem:[#allocation5 + $0xb8] sm:$0xff]
    %v96 = vld [vmem:[#allocation5 + $0xc0] sm:$0xff]
    %v97 = vld [vmem:[#allocation5 + $0xc8] sm:$0xff]
    %v98 = vld [vmem:[#allocation5 + $0xd0] sm:$0xff]
    %v99 = vld [vmem:[#allocation5 + $0xd8] sm:$0xff]
    %v100 = vld [vmem:[#allocation5 + $0xe0] sm:$0xff]
    %v101 = vld [vmem:[#allocation5 + $0xe8] sm:$0xff]
    %v102 = vld [vmem:[#allocation5 + $0xf0] sm:$0xff]
    %v103 = vld [vmem:[#allocation5 + $0xf8] sm:$0xff]
    %v104 = vld [vmem:[#allocation5 + $0x100] sm:$0xff]
    %v105 = vld [vmem:[#allocation5 + $0x108] sm:$0xff]
    %v106 = vld [vmem:[#allocation5 + $0x110] sm:$0xff]
    %v107 = vld [vmem:[#allocation5 + $0x118] sm:$0xff]
    %v108 = vld [vmem:[#allocation5 + $0x120] sm:$0xff]
    %v109 = vld [vmem:[#allocation5 + $0x128] sm:$0xff]
    %v110 = vld [vmem:[#allocation5 + $0x130] sm:$0xff]
    %v111 = vld [vmem:[#allocation5 + $0x138] sm:$0xff]
    %v112 = vld [vmem:[#allocation5 + $0x140] sm:$0xff]
    %v113 = vld [vmem:[#allocation5 + $0x148] sm:$0xff]
    %v114 = vld [vmem:[#allocation5 + $0x150] sm:$0xff]
    %v115 = vld [vmem:[#allocation5 + $0x158] sm:$0xff]
    %v116 = vld [vmem:[#allocation5 + $0x160] sm:$0xff]
    %v117 = vld [vmem:[#allocation5 + $0x168] sm:$0xff]
    %v118 = vld [vmem:[#allocation5 + $0x170] sm:$0xff]
    %v119 = vld [vmem:[#allocation5 + $0x178] sm:$0xff]
    %v120 = vld [vmem:[#allocation5 + $0x180] sm:$0xff]
    %v121 = vld [vmem:[#allocation5 + $0x188] sm:$0xff]
    %v122 = vld [vmem:[#allocation5 + $0x190] sm:$0xff]
    %v123 = vld [vmem:[#allocation5 + $0x198] sm:$0xff]
    %v124 = vld [vmem:[#allocation5 + $0x1a0] sm:$0xff]
    %v125 = vld [vmem:[#allocation5 + $0x1a8] sm:$0xff]
    %v126 = vld [vmem:[#allocation5 + $0x1b0] sm:$0xff]
    %v127 = vld [vmem:[#allocation5 + $0x1b8] sm:$0xff]
    %v128 = vld [vmem:[#allocation5 + $0x1c0] sm:$0xff]
    %v129 = vld [vmem:[#allocation5 + $0x1c8] sm:$0xff]
    %v130 = vld [vmem:[#allocation5 + $0x1d0] sm:$0xff]
    %v131 = vld [vmem:[#allocation5 + $0x1d8] sm:$0xff]
    %v132 = vld [vmem:[#allocation5 + $0x1e0] sm:$0xff]
    %v133 = vld [vmem:[#allocation5 + $0x1e8] sm:$0xff]
    %v134 = vld [vmem:[#allocation5 + $0x1f0] sm:$0xff]
    %v135 = vld [vmem:[#allocation5 + $0x1f8] sm:$0xff]
    %v136 = vld [vmem:[%s2] sm:$0x3]
    %v138 = vlaneseq
    %v139 = vshrl.u32 %v138, 7
    %v140 = vsub.s32 0, %v139
    %v141 = vrot.slane %v136, %v140
    %v142 = vlaneseq
    %v143 = vshrl.u32 %v142, 7
    %v144 = vsub.s32 1, %v143
    %v145 = vrot.slane %v136, %v144
    %148 = vmatprep.subr.mxu0 %v73
    %149 = vmatpush1.msra.mxu0 %v72
    %150 = vmatprep.subr.mxu0 %v75
    %151 = vmatpush1.msra.mxu0 %v74
    %152 = vmatprep.subr.mxu0 %v77
    %153 = vmatpush1.msra.mxu0 %v76
    %154 = vmatprep.subr.mxu0 %v79
    %155 = vmatpush1.msra.mxu0 %v78
    %156 = vmatprep.subr.mxu0 %v81
    %157 = vmatpush1.msra.mxu0 %v80
    %158 = vmatprep.subr.mxu0 %v83
    %159 = vmatpush1.msra.mxu0 %v82
    %160 = vmatprep.subr.mxu0 %v85
    %161 = vmatpush1.msra.mxu0 %v84
    %162 = vmatprep.subr.mxu0 %v87
    %163 = vmatpush1.msra.mxu0 %v86
    %164 = vmatprep.subr.mxu0 %v89
    %165 = vmatpush1.msra.mxu0 %v88
    %166 = vmatprep.subr.mxu0 %v91
    %167 = vmatpush1.msra.mxu0 %v90
    %168 = vmatprep.subr.mxu0 %v93
    %169 = vmatpush1.msra.mxu0 %v92
    %170 = vmatprep.subr.mxu0 %v95
    %171 = vmatpush1.msra.mxu0 %v94
    %172 = vmatprep.subr.mxu0 %v97
    %173 = vmatpush1.msra.mxu0 %v96
    %174 = vmatprep.subr.mxu0 %v99
    %175 = vmatpush1.msra.mxu0 %v98
    %176 = vmatprep.subr.mxu0 %v101
    %177 = vmatpush1.msra.mxu0 %v100
    %178 = vmatprep.subr.mxu0 %v103
    %179 = vmatpush1.msra.mxu0 %v102
    %180 = vmatprep.subr.mxu0 %v105
    %181 = vmatpush1.msra.mxu0 %v104
    %182 = vmatprep.subr.mxu0 %v107
    %183 = vmatpush1.msra.mxu0 %v106
    %184 = vmatprep.subr.mxu0 %v109
    %185 = vmatpush1.msra.mxu0 %v108
    %186 = vmatprep.subr.mxu0 %v111
    %187 = vmatpush1.msra.mxu0 %v110
    %188 = vmatprep.subr.mxu0 %v113
    %189 = vmatpush1.msra.mxu0 %v112
    %190 = vmatprep.subr.mxu0 %v115
    %191 = vmatpush1.msra.mxu0 %v114
    %192 = vmatprep.subr.mxu0 %v117
    %193 = vmatpush1.msra.mxu0 %v116
    %194 = vmatprep.subr.mxu0 %v119
    %195 = vmatpush1.msra.mxu0 %v118
    %196 = vmatprep.subr.mxu0 %v121
    %197 = vmatpush1.msra.mxu0 %v120
    %198 = vmatprep.subr.mxu0 %v123
    %199 = vmatpush1.msra.mxu0 %v122
    %200 = vmatprep.subr.mxu0 %v125
    %201 = vmatpush1.msra.mxu0 %v124
    %202 = vmatprep.subr.mxu0 %v127
    %203 = vmatpush1.msra.mxu0 %v126
    %204 = vmatprep.subr.mxu0 %v129
    %205 = vmatpush1.msra.mxu0 %v128
    %206 = vmatprep.subr.mxu0 %v131
    %207 = vmatpush1.msra.mxu0 %v130
    %208 = vmatprep.subr.mxu0 %v133
    %209 = vmatpush1.msra.mxu0 %v132
    %210 = vmatprep.subr.mxu0 %v135
    %211 = vmatpush1.msra.mxu0 %v134
    %212 = vmatprep.mubr.f32.mxu0 %v69
    %213 = vmatmul.mubr.f32.gmra.mrb[0].mxu0 %v68
    %v214 = vpop.f32.mrb[0].mxu0
    %v215 = vadd.f32 %v141, %v214
    %v216 = vpop.f32.mrb[0].mxu0
    %v217 = vadd.f32 %v145, %v216
    %218 = vmatprep.mubr.f32.mxu0 %v71
    %219 = vmatmul.mubr.f32.gmra.mrb[0].mxu0 %v70
    %v220 = vpop.f32.mrb[0].mxu0
    %v221 = vadd.f32 %v141, %v220
    %v222 = vpop.f32.mrb[0].mxu0
    %v223 = vadd.f32 %v145, %v222
    %224 = vdwg.mxu0
    %v225 = vmul.f32 %v215, 0.5
    %v226 = vmul.f32 %v217, 0.5
    %v227 = vmul.f32 %v221, 0.5
    %v228 = vmul.f32 %v223, 0.5
    %v229 = vmul.f32 %v215, 0.70710677
    %v230 = vmul.f32 %v217, 0.70710677
    %v231 = vmul.f32 %v221, 0.70710677
    %v232 = vmul.f32 %v223, 0.70710677
    %v233 = verf.f32.pop %v229
    %v234 = verf.f32.pop %v230
    %v235 = verf.f32.pop %v231
    %v236 = verf.f32.pop %v232
    %v237 = vadd.f32 %v233, 1.0
    %v238 = vadd.f32 %v234, 1.0
    %v239 = vadd.f32 %v235, 1.0
    %v240 = vadd.f32 %v236, 1.0
    %v241 = vmul.f32 %v225, %v237
    %v242 = vmul.f32 %v226, %v238
    %v243 = vmul.f32 %v227, %v239
    %v244 = vmul.f32 %v228, %v240
    %v245 = vld [vmem:[#allocation7] sm:$0xff]
    %v246 = vld [vmem:[#allocation7 + $0x8] sm:$0xff]
    %v247 = vld [vmem:[#allocation7 + $0x10] sm:$0xff]
    %v248 = vld [vmem:[#allocation7 + $0x18] sm:$0xff]
    %v249 = vld [vmem:[#allocation7 + $0x20] sm:$0xff]
    %v250 = vld [vmem:[#allocation7 + $0x28] sm:$0xff]
    %v251 = vld [vmem:[#allocation7 + $0x30] sm:$0xff]
    %v252 = vld [vmem:[#allocation7 + $0x38] sm:$0xff]
    %v253 = vld [vmem:[#allocation7 + $0x40] sm:$0xff]
    %v254 = vld [vmem:[#allocation7 + $0x48] sm:$0xff]
    %v255 = vld [vmem:[#allocation7 + $0x50] sm:$0xff]
    %v256 = vld [vmem:[#allocation7 + $0x58] sm:$0xff]
    %v257 = vld [vmem:[#allocation7 + $0x60] sm:$0xff]
    %v258 = vld [vmem:[#allocation7 + $0x68] sm:$0xff]
    %v259 = vld [vmem:[#allocation7 + $0x70] sm:$0xff]
    %v260 = vld [vmem:[#allocation7 + $0x78] sm:$0xff]
    %v261 = vld [vmem:[#allocation7 + $0x80] sm:$0xff]
    %v262 = vld [vmem:[#allocation7 + $0x88] sm:$0xff]
    %v263 = vld [vmem:[#allocation7 + $0x90] sm:$0xff]
    %v264 = vld [vmem:[#allocation7 + $0x98] sm:$0xff]
    %v265 = vld [vmem:[#allocation7 + $0xa0] sm:$0xff]
    %v266 = vld [vmem:[#allocation7 + $0xa8] sm:$0xff]
    %v267 = vld [vmem:[#allocation7 + $0xb0] sm:$0xff]
    %v268 = vld [vmem:[#allocation7 + $0xb8] sm:$0xff]
    %v269 = vld [vmem:[#allocation7 + $0xc0] sm:$0xff]
    %v270 = vld [vmem:[#allocation7 + $0xc8] sm:$0xff]
    %v271 = vld [vmem:[#allocation7 + $0xd0] sm:$0xff]
    %v272 = vld [vmem:[#allocation7 + $0xd8] sm:$0xff]
    %v273 = vld [vmem:[#allocation7 + $0xe0] sm:$0xff]
    %v274 = vld [vmem:[#allocation7 + $0xe8] sm:$0xff]
    %v275 = vld [vmem:[#allocation7 + $0xf0] sm:$0xff]
    %v276 = vld [vmem:[#allocation7 + $0xf8] sm:$0xff]
    %v277 = vld [vmem:[%s4] sm:$0x1]
    %v279 = vlaneseq
    %v280 = vshrl.u32 %v279, 7
    %v281 = vsub.s32 0, %v280
    %v282 = vrot.slane %v277, %v281
    %284 = vmatprep.subr.mxu0 0.0
    %285 = vmatpush1.msra.mxu0 %v245
    %286 = vmatprep.subr.mxu0 0.0
    %287 = vmatpush1.msra.mxu0 %v246
    %288 = vmatprep.subr.mxu0 0.0
    %289 = vmatpush1.msra.mxu0 %v247
    %290 = vmatprep.subr.mxu0 0.0
    %291 = vmatpush1.msra.mxu0 %v248
    %292 = vmatprep.subr.mxu0 0.0
    %293 = vmatpush1.msra.mxu0 %v249
    %294 = vmatprep.subr.mxu0 0.0
    %295 = vmatpush1.msra.mxu0 %v250
    %296 = vmatprep.subr.mxu0 0.0
    %297 = vmatpush1.msra.mxu0 %v251
    %298 = vmatprep.subr.mxu0 0.0
    %299 = vmatpush1.msra.mxu0 %v252
    %300 = vmatprep.subr.mxu0 0.0
    %301 = vmatpush1.msra.mxu0 %v253
    %302 = vmatprep.subr.mxu0 0.0
    %303 = vmatpush1.msra.mxu0 %v254
    %304 = vmatprep.subr.mxu0 0.0
    %305 = vmatpush1.msra.mxu0 %v255
    %306 = vmatprep.subr.mxu0 0.0
    %307 = vmatpush1.msra.mxu0 %v256
    %308 = vmatprep.subr.mxu0 0.0
    %309 = vmatpush1.msra.mxu0 %v257
    %310 = vmatprep.subr.mxu0 0.0
    %311 = vmatpush1.msra.mxu0 %v258
    %312 = vmatprep.subr.mxu0 0.0
    %313 = vmatpush1.msra.mxu0 %v259
    %314 = vmatprep.subr.mxu0 0.0
    %315 = vmatpush1.msra.mxu0 %v260
    %316 = vmatprep.subr.mxu0 0.0
    %317 = vmatpush1.msra.mxu0 %v261
    %318 = vmatprep.subr.mxu0 0.0
    %319 = vmatpush1.msra.mxu0 %v262
    %320 = vmatprep.subr.mxu0 0.0
    %321 = vmatpush1.msra.mxu0 %v263
    %322 = vmatprep.subr.mxu0 0.0
    %323 = vmatpush1.msra.mxu0 %v264
    %324 = vmatprep.subr.mxu0 0.0
    %325 = vmatpush1.msra.mxu0 %v265
    %326 = vmatprep.subr.mxu0 0.0
    %327 = vmatpush1.msra.mxu0 %v266
    %328 = vmatprep.subr.mxu0 0.0
    %329 = vmatpush1.msra.mxu0 %v267
    %330 = vmatprep.subr.mxu0 0.0
    %331 = vmatpush1.msra.mxu0 %v268
    %332 = vmatprep.subr.mxu0 0.0
    %333 = vmatpush1.msra.mxu0 %v269
    %334 = vmatprep.subr.mxu0 0.0
    %335 = vmatpush1.msra.mxu0 %v270
    %336 = vmatprep.subr.mxu0 0.0
    %337 = vmatpush1.msra.mxu0 %v271
    %338 = vmatprep.subr.mxu0 0.0
    %339 = vmatpush1.msra.mxu0 %v272
    %340 = vmatprep.subr.mxu0 0.0
    %341 = vmatpush1.msra.mxu0 %v273
    %342 = vmatprep.subr.mxu0 0.0
    %343 = vmatpush1.msra.mxu0 %v274
    %344 = vmatprep.subr.mxu0 0.0
    %345 = vmatpush1.msra.mxu0 %v275
    %346 = vmatprep.subr.mxu0 0.0
    %347 = vmatpush1.msra.mxu0 %v276
    %348 = vmatprep.mubr.f32.mxu0 %v242
    %349 = vmatmul.mubr.f32.gmra.mrb[0].mxu0 %v241
    %v350 = vpop.f32.mrb[0].mxu0
    %v351 = vadd.f32 %v282, %v350
    %v352 = vpop.f32.mrb[0].mxu0
    %353 = vmatprep.mubr.f32.mxu0 %v244
    %354 = vmatmul.mubr.f32.gmra.mrb[0].mxu0 %v243
    %v355 = vpop.f32.mrb[0].mxu0
    %v356 = vadd.f32 %v282, %v355
    %v357 = vpop.f32.mrb[0].mxu0
    %358 = vdwg.mxu0
    %359 = vadd.xlane.f32.xlu0 %v351
    %v360 = vpop.xlane.xlu0 %359
    %361 = vadd.xlane.f32.xlu0 %v356
    %v362 = vpop.xlane.xlu0 %361
    %v363 = vrcp.pop 128.0
    %v364 = vmul.f32 %v360, %v363
    %v365 = vmul.f32 %v362, %v363
    %v366 = vsub.f32 %v351, %v364
    %v367 = vsub.f32 %v356, %v365
    %v368 = vmul.f32 %v366, %v366
    %v369 = vmul.f32 %v367, %v367
    %370 = vadd.xlane.f32.xlu0 %v368
    %v371 = vpop.xlane.xlu0 %370
    %372 = vadd.xlane.f32.xlu0 %v369
    %v373 = vpop.xlane.xlu0 %372
    %v374 = vmul.f32 %v371, %v363
    %v375 = vmul.f32 %v373, %v363
    %v376 = vadd.f32 %v374, 1e-05
    %v377 = vadd.f32 %v375, 1e-05
    %v378 = vrsqrt.pop %v376
    %v379 = vrsqrt.pop %v377
    %v380 = vmul.f32 %v366, %v378
    %v381 = vmul.f32 %v367, %v379
    %v382 = vld [vmem:[%s5] sm:$0x1]
    %v384 = vlaneseq
    %v385 = vshrl.u32 %v384, 7
    %v386 = vsub.s32 0, %v385
    %v387 = vrot.slane %v382, %v386
    %v389 = vmul.f32 %v380, %v387
    %v390 = vmul.f32 %v381, %v387
    %v391 = vld [vmem:[%s6] sm:$0x1]
    %v393 = vlaneseq
    %v394 = vshrl.u32 %v393, 7
    %v395 = vsub.s32 0, %v394
    %v396 = vrot.slane %v391, %v395
    %v398 = vadd.f32 %v389, %v396
    %v399 = vadd.f32 %v390, %v396
    %400 = vst [vmem:[#allocation8] sm:$0xff] %v398
    %401 = vst [vmem:[#allocation8 + $0x8] sm:$0xff] %v399
    // Predicated region
    $region42: #{tpu_custom_call.1} parent=1 // pred_check
      _
    $region43: #{tpu_custom_call.1} parent=1 // pred_check_branch
      %403 = sbr.rel (0) target = $region45
    $region44: #{tpu_custom_call.1} parent=1 // pred_region
      %s405 = ssub.s32 256, 256
      %406 = vsyncadd [#allocation4], %s405
      %s407 = sshll.u32 [#allocation8], 4
      %s408 = int_to_ptr.vmem [resolvable:$true] %s407
      %413 = dma.vmem_to_hbm [thread:$0]  %s408, 256, %s7, [#allocation4], 128, 128, 8
    $region45: #{tpu_custom_call.1} parent=1 // pred_fallthru
      _
    // Predicated region
    $region46: #{tpu_custom_call.1} parent=1 // pred_check
      _
    $region47: #{tpu_custom_call.1} parent=1 // pred_check_branch
      %415 = sbr.rel (0) target = $region49
    $region48: #{tpu_custom_call.1} parent=1 // pred_region
      %416 = dma.done [#allocation4], 256
    $region49: #{tpu_custom_call.1} parent=1 // pred_fallthru
      _
    %417 = vsyncpa [#allocation3], 1
    %418 = vsyncpa [#allocation6], 1
    %419 = vsyncpa [#allocation4], 1

</llo_original>
